<compile_context>
chip_gen: v7x
topology: tpu7x:2x2x1
jax: 0.10.0
libtpu: 0.0.40
codegen_flags: <defaults>
</compile_context>

<pallas_src>
import jax
import jax.numpy as jnp
from jax import lax
from jax.experimental import pallas as pl
from jax.experimental.pallas import tpu as pltpu


def _cdiv(a: int, b: int) -> int:
    return -(-a // b)


def _round_up(x: int, m: int) -> int:
    return _cdiv(x, m) * m


# --------------------------------------------------------------------------
# Kernel
# --------------------------------------------------------------------------
def _mlp_kernel(x_ref, wgu_ref, bg_ref, bu_ref, wd_ref, bd_ref, o_ref, acc_ref):
    """One (TM, TI) step of the fused SwiGLU MLP.

    wgu_ref is the packed (2, TI, hidden) gate|up weight block (transposed,
    row-contiguous in HBM).  gate/up are computed in f32; the gated product
    feeds a partial down projection accumulated in an f32 VMEM scratch along
    the I grid axis.  The last I step adds b_down and stores the output tile.
    """
    j = pl.program_id(1)
    ti = wgu_ref.shape[1]
    hidden = wgu_ref.shape[2]

    x = x_ref[...]
    wgu = wgu_ref[...]                              # (2, ti, hidden)

    # Contract the hidden dim of x with the (row-contiguous) hidden dim of W.
    dimnums = (((1,), (1,)), ((), ()))

    if ti % 128 == 0:
        # Fused gate+up: one weight DMA stream and one MXU sequence producing
        # (TM, 2*ti); the split at `ti` is lane-aligned (128 multiple).
        gu = lax.dot_general(x, wgu.reshape(2 * ti, hidden), dimnums,
                             preferred_element_type=jnp.float32)
        gate = gu[:, :ti] + bg_ref[...]
        up = gu[:, ti:] + bu_ref[...]
    else:
        # Small / unaligned intermediate tile: keep two matmuls so we never
        # slice the result at a non-128 lane offset.
        gate = lax.dot_general(x, wgu[0], dimnums,
                               preferred_element_type=jnp.float32) + bg_ref[...]
        up = lax.dot_general(x, wgu[1], dimnums,
                             preferred_element_type=jnp.float32) + bu_ref[...]

    # SiLU with the reciprocal on the EUP slot (has slack on all generations).
    gate = gate * pl.reciprocal(1.0 + jnp.exp(-gate), approx=True)

    h = (gate * up).astype(wd_ref.dtype)

    # Down projection accumulated in f32 across the I axis.  j==0 writes the
    # first partial directly (saves a (TM, hidden) f32 zero store + load per
    # m-tile); j>0 keeps the single `+= dot` expression so v7x can use the
    # MRB in-place accumulate.
    @pl.when(j == 0)
    def _():
        acc_ref[...] = jnp.dot(h, wd_ref[...],
                               preferred_element_type=jnp.float32)

    @pl.when(j > 0)
    def _():
        acc_ref[...] += jnp.dot(h, wd_ref[...],
                                preferred_element_type=jnp.float32)

    @pl.when(j == pl.num_programs(1) - 1)
    def _():
        o_ref[...] = (acc_ref[...] + bd_ref[...]).astype(o_ref.dtype)


# --------------------------------------------------------------------------
# Generation-/dtype-aware tile sizing
# --------------------------------------------------------------------------
def _device_info():
    """Returns (vmem_capacity_bytes, device_kind_lowercase) with fallbacks."""
    kind = ""
    try:
        kind = jax.devices()[0].device_kind.lower()
    except Exception:
        pass
    vmem = None
    try:
        vmem = int(pltpu.get_tpu_info().vmem_capacity_bytes)
    except Exception:
        vmem = None
    if vmem is None:
        if "v7" in kind:
            vmem = 64 * 1024 * 1024
        elif any(g in kind for g in ("v4", "v5", "v6")):
            vmem = 128 * 1024 * 1024
        else:
            vmem = 64 * 1024 * 1024           # conservative default
    return vmem, kind


def _largest_divisor_tile(total: int, cap: int) -> int:
    """Largest multiple of 128 dividing `total` (a 128-multiple), <= cap."""
    t = max(128, (min(cap, total) // 128) * 128)
    while total % t:
        t -= 128
    return t


def _choose_i_tiling(inter: int, ti_target: int):
    """Pick (ti, i_pad) with ti | i_pad and ti % 128 == 0 (or full-extent)."""
    if inter <= max(ti_target, 128):
        return inter, inter                       # single full-extent block
    if inter % 128 == 0:
        ti = _largest_divisor_tile(inter, ti_target)
        if ti >= min(512, ti_target):             # big enough -> no weight pad
            return ti, inter
    ti = max(128, (ti_target // 128) * 128)
    return ti, _round_up(inter, ti)


def _choose_tiles(M, hidden, inter, x_bytes, w_bytes, o_bytes,
                  vmem_budget, multi_tc, tm_target, ti_target, sub):
    m_pad0 = _round_up(M, sub)

    def est(tm, ti):
        blocks = (tm * hidden * x_bytes            # x tile
                  + 3 * ti * hidden * w_bytes      # packed gate/up + down W
                  + (2 * ti + hidden) * 4          # biases (upper bound)
                  + tm * hidden * o_bytes)         # out tile
        scratch = tm * hidden * 4                  # f32 accumulator
        interm = tm * 2 * ti * 4 + tm * ti * max(w_bytes, 2)  # gu(f32) + h
        return 2 * blocks + scratch + interm       # 2x: double-buffered DMA

    while True:
        m_tiles = max(1, _cdiv(m_pad0, tm_target))
        if multi_tc and m_tiles == 1 and m_pad0 >= 2 * sub:
            m_tiles = 2                            # keep both TensorCores busy
        tm = _round_up(_cdiv(m_pad0, m_tiles), sub)
        ti, i_pad = _choose_i_tiling(inter, ti_target)
        if est(tm, ti) <= vmem_budget:
            break
        # Shrink TI first (weight restreaming scales with 1/TM, so keep TM
        # large); fall back to shrinking TM once TI hits its floor.
        if ti_target > 128 and (ti >= tm or tm_target <= sub):
            ti_target = max(128, ti_target // 2)
        elif tm_target > sub:
            tm_target = max(sub, tm_target // 2)
        else:
            break                                  # smallest tiles already
    return tm, tm * m_tiles, ti, i_pad


# --------------------------------------------------------------------------
# Wrapper
# --------------------------------------------------------------------------
def mlp_pallas(x, w_gate, b_gate, w_up, b_up, w_down, b_down,
               *, compute_dtype=None, tm=None, ti=None):
    """Fused SwiGLU MLP:  silu(x @ Wg + bg) * (x @ Wu + bu) @ Wd + bd.

    x: (batch, seq, hidden).  Weights are (in_features, out_features),
    biases (1, out_features).  Pass compute_dtype=jnp.bfloat16 to run the
    MXU operands in bf16 (2-4x MXU throughput, half the weight DMA bytes)
    while keeping the f32 down-projection accumulator; the default preserves
    the input dtype exactly.  tm/ti are optional tile-size *targets*.
    """
    batch, seq, hidden = x.shape
    inter = w_gate.shape[1]
    assert w_up.shape == (hidden, inter) and w_down.shape == (inter, hidden)
    out_dtype = x.dtype
    M = batch * seq

    mxu_dtype = jnp.dtype(compute_dtype) if compute_dtype is not None else jnp.dtype(x.dtype)
    x_bytes = w_bytes = mxu_dtype.itemsize
    o_bytes = jnp.dtype(out_dtype).itemsize
    sub = max(8, 32 // x_bytes)            # sublane pack: 8 f32 / 16 bf16 / 32 int8

    vmem_cap, kind = _device_info()
    multi_tc = ("v7" in kind) or ("v4" in kind) or ("v5p" in kind)
    vmem_limit = min(100 << 20, int(vmem_cap * 0.78))   # ~100 MiB v5e/v6e, ~50 MiB v7x
    big_vmem = vmem_limit >= (80 << 20)

    tm_target = tm if tm is not None else (1024 if big_vmem else 512)
    ti_target = ti if ti is not None else (1024 if big_vmem else 512)
    tm_target = max(sub, _round_up(tm_target, sub))
    ti_target = max(128, ti_target)

    tm_sz, m_pad, ti_sz, i_pad = _choose_tiles(
        M, hidden, inter, x_bytes, w_bytes, o_bytes,
        int(vmem_limit * 0.9), multi_tc, tm_target, ti_target, sub)

    # ---- operand packing / layout prep -------------------------------------
    # Gate and up weights are packed into one (2, inter, hidden) operand,
    # transposed so each (ti, hidden) slab is row-contiguous in HBM (large DMA
    # bursts) and streamed through a single BlockSpec.
    # TODO(synk): in production, pre-pack the weights once at load time so this
    #             transpose/stack (and any padding) is off the hot path.
    w_gu = jnp.stack([w_gate.T, w_up.T])           # (2, inter, hidden)
    wd = w_down                                    # (inter, hidden) row-contiguous
    bg, bu, bd = b_gate, b_up, b_down

    x2d = x.reshape(M, hidden)
    if mxu_dtype != x2d.dtype:
        x2d = x2d.astype(mxu_dtype)
    if mxu_dtype != w_gu.dtype:
        w_gu = w_gu.astype(mxu_dtype)
        wd = wd.astype(mxu_dtype)

    # Zero-pad only when shapes are ragged (padded rows/cols contribute 0).
    if m_pad != M:
        x2d = jnp.pad(x2d, ((0, m_pad - M), (0, 0)))
    if i_pad != inter:
        p = i_pad - inter
        w_gu = jnp.pad(w_gu, ((0, 0), (0, p), (0, 0)))
        wd = jnp.pad(wd, ((0, p), (0, 0)))
        bg = jnp.pad(bg, ((0, 0), (0, p)))
        bu = jnp.pad(bu, ((0, 0), (0, p)))

    grid = (m_pad // tm_sz, i_pad // ti_sz)

    out2d = pl.pallas_call(
        _mlp_kernel,
        out_shape=jax.ShapeDtypeStruct((m_pad, hidden), out_dtype),
        grid_spec=pltpu.PrefetchScalarGridSpec(
            num_scalar_prefetch=0,
            grid=grid,
            in_specs=[
                pl.BlockSpec((tm_sz, hidden), lambda m, j: (m, 0)),       # x
                # If xprof shows exposed weight DMA on 128 MiB chips, add
                # pipeline_mode=pl.Buffered(3) to the two weight specs below.
                pl.BlockSpec((2, ti_sz, hidden), lambda m, j: (0, j, 0)),  # Wg|Wu
                pl.BlockSpec((1, ti_sz), lambda m, j: (0, j)),            # b_gate
                pl.BlockSpec((1, ti_sz), lambda m, j: (0, j)),            # b_up
                pl.BlockSpec((ti_sz, hidden), lambda m, j: (j, 0)),       # W_down
                pl.BlockSpec((1, hidden), lambda m, j: (0, 0)),           # b_down
            ],
            out_specs=pl.BlockSpec((tm_sz, hidden), lambda m, j: (m, 0)),
            scratch_shapes=[pltpu.VMEM((tm_sz, hidden), jnp.float32)],
        ),
        compiler_params=pltpu.CompilerParams(
            # M tiles are independent (megacore-parallel on multi-TC chips);
            # the I axis carries the down-proj accumulator -> arbitrary, last.
            dimension_semantics=("parallel", "arbitrary"),
            vmem_limit_bytes=vmem_limit,
        ),
    )(x2d, w_gu, bg, bu, wd, bd)

    if m_pad != M:
        out2d = out2d[:M]
    return out2d.reshape(batch, seq, hidden)


# --------------------------------------------------------------------------
# Reference + harness
# --------------------------------------------------------------------------
def mlp_reference(x, w_gate, b_gate, w_up, b_up, w_down, b_down):
    gate = jax.nn.silu(x @ w_gate + b_gate)
    up = x @ w_up + b_up
    return (gate * up) @ w_down + b_down


def _make_params(key, hidden, inter, dtype):
    k_x, k_wg, k_bg, k_wu, k_bu, k_wd, k_bd = jax.random.split(key, 7)

    def init_linear(kw, kb, fan_in, fan_out):
        bound = 1.0 / jnp.sqrt(fan_in)
        w = jax.random.uniform(kw, (fan_in, fan_out), dtype, -bound, bound)
        b = jax.random.uniform(kb, (1, fan_out), dtype, -bound, bound)
        return w, b

    w_gate, b_gate = init_linear(k_wg, k_bg, hidden, inter)
    w_up, b_up = init_linear(k_wu, k_bu, hidden, inter)
    w_down, b_down = init_linear(k_wd, k_bd, inter, hidden)
    return k_x, (w_gate, b_gate, w_up, b_up, w_down, b_down)


if __name__ == "__main__":
    key = jax.random.PRNGKey(0)

    # ------------- check 1: small shapes, f32 (approx-silu tolerance) ------
    batch, seq, hidden, inter = 2, 8, 32, 64
    k_x, params = _make_params(key, hidden, inter, jnp.float32)
    x = jax.random.normal(k_x, (batch, seq, hidden), jnp.float32)

    out = jax.block_until_ready(mlp_pallas(x, *params))
    ref = mlp_reference(x, *params)
    assert not bool(jnp.isnan(out).any())
    assert jnp.allclose(out, ref, atol=5e-3, rtol=5e-3)

    # ------------- check 2: native bf16 path -------------------------------
    x_bf = x.astype(jnp.bfloat16)
    params_bf = tuple(p.astype(jnp.bfloat16) for p in params)
    out_bf = jax.block_until_ready(mlp_pallas(x_bf, *params_bf))
    ref_bf = mlp_reference(x_bf.astype(jnp.float32),
                           *(p.astype(jnp.float32) for p in params_bf))
    assert not bool(jnp.isnan(out_bf.astype(jnp.float32)).any())
    assert jnp.allclose(out_bf.astype(jnp.float32), ref_bf, atol=5e-2, rtol=5e-2)

    # ------------- check 3: exercise (M, I) tiling + f32 accumulator -------
    key2 = jax.random.PRNGKey(1)
    b2, s2, h2, i2 = 4, 64, 128, 256          # M=256 -> 2x2 grid with tm=ti=128
    k_x2, params2 = _make_params(key2, h2, i2, jnp.float32)
    x2 = jax.random.normal(k_x2, (b2, s2, h2), jnp.float32)

    out2 = jax.block_until_ready(mlp_pallas(x2, *params2, tm=128, ti=128))
    ref2 = mlp_reference(x2, *params2)
    assert not bool(jnp.isnan(out2).any())
    assert jnp.allclose(out2, ref2, atol=5e-3, rtol=5e-3)

    # ------------- check 4: f32 inputs, bf16 MXU operands ------------------
    out3 = jax.block_until_ready(
        mlp_pallas(x2, *params2, compute_dtype=jnp.bfloat16, tm=128, ti=128))
    assert not bool(jnp.isnan(out3).any())
    assert jnp.allclose(out3, ref2, atol=5e-2, rtol=5e-2)

    print("KERNEL_OK")
</pallas_src>

<mosaic_0001>
module attributes {stable_mosaic.version = 11 : i64} {
  func.func @_mlp_kernel(%arg0: i32, %arg1: i32, %arg2: memref<16x32xf32, #tpu.memory_space<vmem>>, %arg3: memref<2x64x32xf32, #tpu.memory_space<vmem>>, %arg4: memref<1x64xf32, #tpu.memory_space<vmem>>, %arg5: memref<1x64xf32, #tpu.memory_space<vmem>>, %arg6: memref<64x32xf32, #tpu.memory_space<vmem>>, %arg7: memref<1x32xf32, #tpu.memory_space<vmem>>, %arg8: memref<16x32xf32, #tpu.memory_space<vmem>>, %arg9: memref<16x32xf32, #tpu.memory_space<vmem>>) attributes {dimension_semantics = [#tpu.dimension_semantics<parallel>, #tpu.dimension_semantics<arbitrary>], iteration_bounds = array<i64: 1, 1>, scalar_prefetch = 0 : i64, scratch_operands = 1 : i64, tpu.core_type = #tpu.core_type<tc>, window_params = [{transform_indices = @transform_0, window_bounds = array<i64: 16, 32>}, {transform_indices = @transform_1, window_bounds = array<i64: 2, 64, 32>}, {transform_indices = @transform_2, window_bounds = array<i64: 1, 64>}, {transform_indices = @transform_3, window_bounds = array<i64: 1, 64>}, {transform_indices = @transform_4, window_bounds = array<i64: 64, 32>}, {pipeline_mode = #tpu.pipeline_mode<synchronous>, transform_indices = @transform_5, window_bounds = array<i64: 1, 32>}, {transform_indices = @transform_6, window_bounds = array<i64: 16, 32>}]} {
    %c0 = arith.constant 0 : index
    %c0_0 = arith.constant 0 : index
    %0 = vector.load %arg2[%c0, %c0_0] : memref<16x32xf32, #tpu.memory_space<vmem>>, vector<16x32xf32>
    %c0_1 = arith.constant 0 : index
    %c0_2 = arith.constant 0 : index
    %c0_3 = arith.constant 0 : index
    %1 = vector.load %arg3[%c0_1, %c0_2, %c0_3] : memref<2x64x32xf32, #tpu.memory_space<vmem>>, vector<2x64x32xf32>
    %2 = vector.extract_strided_slice %1 {offsets = [0, 0, 0], sizes = [1, 64, 32], strides = [1, 1, 1]} : vector<2x64x32xf32> to vector<1x64x32xf32>
    %3 = vector.shape_cast %2 : vector<1x64x32xf32> to vector<64x32xf32>
    %cst = arith.constant dense<0.000000e+00> : vector<16x64xf32>
    %4 = tpu.matmul %0, %3, %cst {dimension_numbers = #tpu.dot_dimension_numbers<[1], [1], [0], [0], [0, 0, 1, 0], [], []>} : vector<16x32xf32>, vector<64x32xf32>, vector<16x64xf32> -> vector<16x64xf32>
    %c0_4 = arith.constant 0 : index
    %c0_5 = arith.constant 0 : index
    %5 = vector.load %arg4[%c0_4, %c0_5] : memref<1x64xf32, #tpu.memory_space<vmem>>, vector<1x64xf32>
    %6 = vector.broadcast %5 : vector<1x64xf32> to vector<16x64xf32>
    %7 = arith.addf %4, %6 : vector<16x64xf32>
    %8 = vector.extract_strided_slice %1 {offsets = [1, 0, 0], sizes = [1, 64, 32], strides = [1, 1, 1]} : vector<2x64x32xf32> to vector<1x64x32xf32>
    %9 = vector.shape_cast %8 : vector<1x64x32xf32> to vector<64x32xf32>
    %cst_6 = arith.constant dense<0.000000e+00> : vector<16x64xf32>
    %10 = tpu.matmul %0, %9, %cst_6 {dimension_numbers = #tpu.dot_dimension_numbers<[1], [1], [0], [0], [0, 0, 1, 0], [], []>} : vector<16x32xf32>, vector<64x32xf32>, vector<16x64xf32> -> vector<16x64xf32>
    %c0_7 = arith.constant 0 : index
    %c0_8 = arith.constant 0 : index
    %11 = vector.load %arg5[%c0_7, %c0_8] : memref<1x64xf32, #tpu.memory_space<vmem>>, vector<1x64xf32>
    %12 = vector.broadcast %11 : vector<1x64xf32> to vector<16x64xf32>
    %13 = arith.addf %10, %12 : vector<16x64xf32>
    %cst_9 = arith.constant 0.000000e+00 : f32
    %14 = vector.broadcast %cst_9 : f32 to vector<16x64xf32>
    %15 = arith.subf %14, %7 : vector<16x64xf32>
    %16 = math.exp %15 : vector<16x64xf32>
    %cst_10 = arith.constant 1.000000e+00 : f32
    %17 = vector.broadcast %cst_10 : f32 to vector<16x64xf32>
    %18 = arith.addf %17, %16 : vector<16x64xf32>
    %19 = tpu.reciprocal %18 {approx = true} : vector<16x64xf32> -> vector<16x64xf32>
    %20 = arith.mulf %7, %19 : vector<16x64xf32>
    %21 = arith.mulf %20, %13 : vector<16x64xf32>
    %c0_i32 = arith.constant 0 : i32
    %22 = arith.cmpi eq, %arg1, %c0_i32 : i32
    %23 = arith.extui %22 : i1 to i32
    %c0_i32_11 = arith.constant 0 : i32
    %24 = arith.cmpi ne, %23, %c0_i32_11 : i32
    scf.if %24 {
      %c0_16 = arith.constant 0 : index
      %c0_17 = arith.constant 0 : index
      %31 = vector.load %arg6[%c0_16, %c0_17] : memref<64x32xf32, #tpu.memory_space<vmem>>, vector<64x32xf32>
      %cst_18 = arith.constant dense<0.000000e+00> : vector<16x32xf32>
      %32 = tpu.matmul %21, %31, %cst_18 {dimension_numbers = #tpu.dot_dimension_numbers<[1], [0], [0], [1], [0, 0, 1, 1], [], []>} : vector<16x64xf32>, vector<64x32xf32>, vector<16x32xf32> -> vector<16x32xf32>
      %c0_19 = arith.constant 0 : index
      %c0_20 = arith.constant 0 : index
      %33 = vector.load %arg9[%c0_19, %c0_20] : memref<16x32xf32, #tpu.memory_space<vmem>>, vector<16x32xf32>
      tpu.vector_store %arg9[%c0_19, %c0_20], %32 {strides = array<i32>} : memref<16x32xf32, #tpu.memory_space<vmem>>, vector<16x32xf32>,
    } else {
    }
    %c0_i32_12 = arith.constant 0 : i32
    %25 = arith.cmpi sgt, %arg1, %c0_i32_12 : i32
    %26 = arith.extui %25 : i1 to i32
    %c0_i32_13 = arith.constant 0 : i32
    %27 = arith.cmpi ne, %26, %c0_i32_13 : i32
    scf.if %27 {
      %c0_16 = arith.constant 0 : index
      %c0_17 = arith.constant 0 : index
      %31 = vector.load %arg9[%c0_16, %c0_17] : memref<16x32xf32, #tpu.memory_space<vmem>>, vector<16x32xf32>
      %c0_18 = arith.constant 0 : index
      %c0_19 = arith.constant 0 : index
      %32 = vector.load %arg6[%c0_18, %c0_19] : memref<64x32xf32, #tpu.memory_space<vmem>>, vector<64x32xf32>
      %cst_20 = arith.constant dense<0.000000e+00> : vector<16x32xf32>
      %33 = tpu.matmul %21, %32, %cst_20 {dimension_numbers = #tpu.dot_dimension_numbers<[1], [0], [0], [1], [0, 0, 1, 1], [], []>} : vector<16x64xf32>, vector<64x32xf32>, vector<16x32xf32> -> vector<16x32xf32>
      %34 = arith.addf %31, %33 : vector<16x32xf32>
      %c0_21 = arith.constant 0 : index
      %c0_22 = arith.constant 0 : index
      %35 = vector.load %arg9[%c0_21, %c0_22] : memref<16x32xf32, #tpu.memory_space<vmem>>, vector<16x32xf32>
      tpu.vector_store %arg9[%c0_21, %c0_22], %34 {strides = array<i32>} : memref<16x32xf32, #tpu.memory_space<vmem>>, vector<16x32xf32>,
    } else {
    }
    %c0_i32_14 = arith.constant 0 : i32
    %28 = arith.cmpi eq, %arg1, %c0_i32_14 : i32
    %29 = arith.extui %28 : i1 to i32
    %c0_i32_15 = arith.constant 0 : i32
    %30 = arith.cmpi ne, %29, %c0_i32_15 : i32
    scf.if %30 {
      %c0_16 = arith.constant 0 : index
      %c0_17 = arith.constant 0 : index
      %31 = vector.load %arg9[%c0_16, %c0_17] : memref<16x32xf32, #tpu.memory_space<vmem>>, vector<16x32xf32>
      %c0_18 = arith.constant 0 : index
      %c0_19 = arith.constant 0 : index
      %32 = vector.load %arg7[%c0_18, %c0_19] : memref<1x32xf32, #tpu.memory_space<vmem>>, vector<1x32xf32>
      %33 = vector.broadcast %32 : vector<1x32xf32> to vector<16x32xf32>
      %34 = arith.addf %31, %33 : vector<16x32xf32>
      %c0_20 = arith.constant 0 : index
      %c0_21 = arith.constant 0 : index
      %35 = vector.load %arg8[%c0_20, %c0_21] : memref<16x32xf32, #tpu.memory_space<vmem>>, vector<16x32xf32>
      tpu.vector_store %arg8[%c0_20, %c0_21], %34 {strides = array<i32>} : memref<16x32xf32, #tpu.memory_space<vmem>>, vector<16x32xf32>,
    } else {
    }
    return
  }
  func.func @transform_0(%arg0: i32, %arg1: i32) -> (i32, i32) {
    %c0_i32 = arith.constant 0 : i32
    %c0_i32_0 = arith.constant 0 : i32
    return %arg0, %c0_i32 : i32, i32
  }
  func.func @transform_1(%arg0: i32, %arg1: i32) -> (i32, i32, i32) {
    %c0_i32 = arith.constant 0 : i32
    %c0_i32_0 = arith.constant 0 : i32
    %c0_i32_1 = arith.constant 0 : i32
    return %c0_i32, %arg1, %c0_i32_0 : i32, i32, i32
  }
  func.func @transform_2(%arg0: i32, %arg1: i32) -> (i32, i32) {
    %c0_i32 = arith.constant 0 : i32
    %c0_i32_0 = arith.constant 0 : i32
    return %c0_i32, %arg1 : i32, i32
  }
  func.func @transform_3(%arg0: i32, %arg1: i32) -> (i32, i32) {
    %c0_i32 = arith.constant 0 : i32
    %c0_i32_0 = arith.constant 0 : i32
    return %c0_i32, %arg1 : i32, i32
  }
  func.func @transform_4(%arg0: i32, %arg1: i32) -> (i32, i32) {
    %c0_i32 = arith.constant 0 : i32
    %c0_i32_0 = arith.constant 0 : i32
    return %arg1, %c0_i32 : i32, i32
  }
  func.func @transform_5(%arg0: i32, %arg1: i32) -> (i32, i32) {
    %c0_i32 = arith.constant 0 : i32
    %c0_i32_0 = arith.constant 0 : i32
    %c0_i32_1 = arith.constant 0 : i32
    return %c0_i32, %c0_i32_0 : i32, i32
  }
  func.func @transform_6(%arg0: i32, %arg1: i32) -> (i32, i32) {
    %c0_i32 = arith.constant 0 : i32
    %c0_i32_0 = arith.constant 0 : i32
    return %arg0, %c0_i32 : i32, i32
  }
}

</mosaic_0001>

<llo_original>
// kernel: tpu_custom_call.1
$region0: #{tpu_custom_call.1}
  #allocation0 [shape = 'u32[]', space=smem, size = 0x4, offset = 0x4, fixed_abs, tag = 'smem constant byte address 0x4 - core index']
  #allocation1 [shape = 'u32[144,128]{1,0:T(1,128)}', space=vmem, size = 0x12000, scoped, tag = 'internal scratch']
  #allocation2 [shape = 'f32[16,32]{1,0:T(8,128)}', space=vmem, size = 0x2000, scoped, tag = 'scratch operand']
  %s0 = inlined_call_operand.vmem [shape: f32[16,32], index: 0, kind: input, shape index: {}]
  %s1 = inlined_call_operand.vmem [shape: f32[2,64,32], index: 1, kind: input, shape index: {}]
  %s2 = inlined_call_operand.vmem [shape: f32[1,64], index: 2, kind: input, shape index: {}]
  %s3 = inlined_call_operand.vmem [shape: f32[1,64], index: 3, kind: input, shape index: {}]
  %s4 = inlined_call_operand.vmem [shape: f32[64,32], index: 4, kind: input, shape index: {}]
  %s5 = inlined_call_operand.vmem [shape: f32[1,32], index: 5, kind: input, shape index: {}]
  %s6 = inlined_call_operand.hbm [shape: f32[16,32], index: 6, kind: output, shape index: {}]
  %s7 = sld [smem:[#allocation0]]
  $region46: #{tpu_custom_call.1} parent=0
    _
  %s9 = ssub.s32 1, %s7
  %s10 = scalar_select 0, %s9, %s7
  $region1: #{tpu_custom_call.1} parent=0
    #allocation3 [shape = 'u8[8192]{0}', space=vmem, size = 0x2000, scoped, tag = 'output window, operand 0, single buffered']
    #allocation4 [shape = 's32[1]{0}', space=sflag, size = 0x4, scoped, tag = 'scoped memory for tpu_custom_call.1']
    %11 = vsyncpa [#allocation4], 0
    // Predicated region
    $region2: #{tpu_custom_call.1} parent=1 // pred_check
      _
    $region3: #{tpu_custom_call.1} parent=1 // pred_check_branch
      %13 = sbr.rel (0) target = $region5
    $region4: #{tpu_custom_call.1} parent=1 // pred_region
      _
    $region5: #{tpu_custom_call.1} parent=1 // pred_fallthru
      _
    // Predicated region
    $region6: #{tpu_custom_call.1} parent=1 // pred_check
      _
    $region7: #{tpu_custom_call.1} parent=1 // pred_check_branch
      %15 = sbr.rel (0) target = $region9
    $region8: #{tpu_custom_call.1} parent=1 // pred_region
      _
    $region9: #{tpu_custom_call.1} parent=1 // pred_fallthru
      _
    // Predicated region
    $region10: #{tpu_custom_call.1} parent=1 // pred_check
      _
    $region11: #{tpu_custom_call.1} parent=1 // pred_check_branch
      %17 = sbr.rel (0) target = $region13
    $region12: #{tpu_custom_call.1} parent=1 // pred_region
      _
    $region13: #{tpu_custom_call.1} parent=1 // pred_fallthru
      _
    // Predicated region
    $region14: #{tpu_custom_call.1} parent=1 // pred_check
      _
    $region15: #{tpu_custom_call.1} parent=1 // pred_check_branch
      %19 = sbr.rel (0) target = $region17
    $region16: #{tpu_custom_call.1} parent=1 // pred_region
      _
    $region17: #{tpu_custom_call.1} parent=1 // pred_fallthru
      _
    // Predicated region
    $region18: #{tpu_custom_call.1} parent=1 // pred_check
      _
    $region19: #{tpu_custom_call.1} parent=1 // pred_check_branch
      %21 = sbr.rel (0) target = $region21
    $region20: #{tpu_custom_call.1} parent=1 // pred_region
      _
    $region21: #{tpu_custom_call.1} parent=1 // pred_fallthru
      _
    // Predicated region
    $region22: #{tpu_custom_call.1} parent=1 // pred_check
      _
    $region23: #{tpu_custom_call.1} parent=1 // pred_check_branch
      %23 = sbr.rel (0) target = $region25
    $region24: #{tpu_custom_call.1} parent=1 // pred_region
      _
    $region25: #{tpu_custom_call.1} parent=1 // pred_fallthru
      _
    %v24 = vld [vmem:[%s0] sm:$0xff]
    %v25 = vld [vmem:[%s0 + $0x8] sm:$0xff]
    %v26 = vld [vmem:[%s1] sm:$0xff]
    %v27 = vld [vmem:[%s1 + $0x8] sm:$0xff]
    %v28 = vld [vmem:[%s1 + $0x10] sm:$0xff]
    %v29 = vld [vmem:[%s1 + $0x18] sm:$0xff]
    %v30 = vld [vmem:[%s1 + $0x20] sm:$0xff]
    %v31 = vld [vmem:[%s1 + $0x28] sm:$0xff]
    %v32 = vld [vmem:[%s1 + $0x30] sm:$0xff]
    %v33 = vld [vmem:[%s1 + $0x38] sm:$0xff]
    %v34 = vld [vmem:[%s1 + $0x40] sm:$0xff]
    %v35 = vld [vmem:[%s1 + $0x48] sm:$0xff]
    %v36 = vld [vmem:[%s1 + $0x50] sm:$0xff]
    %v37 = vld [vmem:[%s1 + $0x58] sm:$0xff]
    %v38 = vld [vmem:[%s1 + $0x60] sm:$0xff]
    %v39 = vld [vmem:[%s1 + $0x68] sm:$0xff]
    %v40 = vld [vmem:[%s1 + $0x70] sm:$0xff]
    %v41 = vld [vmem:[%s1 + $0x78] sm:$0xff]
    %v42 = vld [vmem:[%s2] sm:$0x1]
    %v44 = vlaneseq
    %v45 = vshrl.u32 %v44, 7
    %v46 = vsub.s32 0, %v45
    %v47 = vrot.slane %v42, %v46
    %vm49 = vcmask 261120
    %v51 = vsel %vm49, %v24, 0
    %v54 = vsel %vm49, %v25, 0
    %v57 = vsel %vm49, %v26, 0
    %v60 = vsel %vm49, %v27, 0
    %v63 = vsel %vm49, %v28, 0
    %v66 = vsel %vm49, %v29, 0
    %v69 = vsel %vm49, %v30, 0
    %v72 = vsel %vm49, %v31, 0
    %v75 = vsel %vm49, %v32, 0
    %v78 = vsel %vm49, %v33, 0
    %80 = vmatprep.subr.mxu0 0.0
    %81 = vmatpush1.xpose.msra.mxu0 %v57
    %82 = vmatprep.subr.mxu0 0.0
    %83 = vmatpush1.xpose.msra.mxu0 %v60
    %84 = vmatprep.subr.mxu0 0.0
    %85 = vmatpush1.xpose.msra.mxu0 %v63
    %86 = vmatprep.subr.mxu0 0.0
    %87 = vmatpush1.xpose.msra.mxu0 %v66
    %88 = vmatprep.subr.mxu0 0.0
    %89 = vmatpush1.xpose.msra.mxu0 %v69
    %90 = vmatprep.subr.mxu0 0.0
    %91 = vmatpush1.xpose.msra.mxu0 %v72
    %92 = vmatprep.subr.mxu0 0.0
    %93 = vmatpush1.xpose.msra.mxu0 %v75
    %94 = vmatprep.subr.mxu0 0.0
    %95 = vmatpush1.xpose.msra.mxu0 %v78
    %96 = vmatprep.subr.mxu0 0.0
    %97 = vmatpush1.xpose.msra.mxu0 0.0
    %98 = vmatprep.subr.mxu0 0.0
    %99 = vmatpush1.xpose.msra.mxu0 0.0
    %100 = vmatprep.subr.mxu0 0.0
    %101 = vmatpush1.xpose.msra.mxu0 0.0
    %102 = vmatprep.subr.mxu0 0.0
    %103 = vmatpush1.xpose.msra.mxu0 0.0
    %104 = vmatprep.subr.mxu0 0.0
    %105 = vmatpush1.xpose.msra.mxu0 0.0
    %106 = vmatprep.subr.mxu0 0.0
    %107 = vmatpush1.xpose.msra.mxu0 0.0
    %108 = vmatprep.subr.mxu0 0.0
    %109 = vmatpush1.xpose.msra.mxu0 0.0
    %110 = vmatprep.subr.mxu0 0.0
    %111 = vmatpush1.xpose.msra.mxu0 0.0
    %112 = vmatprep.subr.mxu0 0.0
    %113 = vmatpush1.xpose.msra.mxu0 0.0
    %114 = vmatprep.subr.mxu0 0.0
    %115 = vmatpush1.xpose.msra.mxu0 0.0
    %116 = vmatprep.subr.mxu0 0.0
    %117 = vmatpush1.xpose.msra.mxu0 0.0
    %118 = vmatprep.subr.mxu0 0.0
    %119 = vmatpush1.xpose.msra.mxu0 0.0
    %120 = vmatprep.subr.mxu0 0.0
    %121 = vmatpush1.xpose.msra.mxu0 0.0
    %122 = vmatprep.subr.mxu0 0.0
    %123 = vmatpush1.xpose.msra.mxu0 0.0
    %124 = vmatprep.subr.mxu0 0.0
    %125 = vmatpush1.xpose.msra.mxu0 0.0
    %126 = vmatprep.subr.mxu0 0.0
    %127 = vmatpush1.xpose.msra.mxu0 0.0
    %128 = vmatprep.subr.mxu0 0.0
    %129 = vmatpush1.xpose.msra.mxu0 0.0
    %130 = vmatprep.subr.mxu0 0.0
    %131 = vmatpush1.xpose.msra.mxu0 0.0
    %132 = vmatprep.subr.mxu0 0.0
    %133 = vmatpush1.xpose.msra.mxu0 0.0
    %134 = vmatprep.subr.mxu0 0.0
    %135 = vmatpush1.xpose.msra.mxu0 0.0
    %136 = vmatprep.subr.mxu0 0.0
    %137 = vmatpush1.xpose.msra.mxu0 0.0
    %138 = vmatprep.subr.mxu0 0.0
    %139 = vmatpush1.xpose.msra.mxu0 0.0
    %140 = vmatprep.subr.mxu0 0.0
    %141 = vmatpush1.xpose.msra.mxu0 0.0
    %142 = vmatprep.subr.mxu0 0.0
    %143 = vmatpush1.xpose.msra.mxu0 0.0
    %144 = vmatprep.mubr.f32.mxu0 0.0
    %145 = vmatmul.mubr.f32.gmra.mrb[0].mxu0 %v51
    %v146 = vpop.f32.mrb[0].mxu0
    %v147 = vadd.f32 %v47, %v146
    %v148 = vpop.f32.mrb[0].mxu0
    %149 = vmatprep.mubr.f32.mxu0 0.0
    %150 = vmatmul.mubr.f32.gmra.mrb[0].mxu0 %v54
    %v151 = vpop.f32.mrb[0].mxu0
    %v152 = vadd.f32 %v47, %v151
    %v153 = vpop.f32.mrb[0].mxu0
    %154 = vdwg.mxu0
    %v155 = vld [vmem:[%s3] sm:$0x1]
    %v157 = vlaneseq
    %v158 = vshrl.u32 %v157, 7
    %v159 = vsub.s32 0, %v158
    %v160 = vrot.slane %v155, %v159
    %v163 = vsel %vm49, %v34, 0
    %v166 = vsel %vm49, %v35, 0
    %v169 = vsel %vm49, %v36, 0
    %v172 = vsel %vm49, %v37, 0
    %v175 = vsel %vm49, %v38, 0
    %v178 = vsel %vm49, %v39, 0
    %v181 = vsel %vm49, %v40, 0
    %v184 = vsel %vm49, %v41, 0
    %186 = vmatprep.subr.mxu0 0.0
    %187 = vmatpush1.xpose.msra.mxu0 %v163
    %188 = vmatprep.subr.mxu0 0.0
    %189 = vmatpush1.xpose.msra.mxu0 %v166
    %190 = vmatprep.subr.mxu0 0.0
    %191 = vmatpush1.xpose.msra.mxu0 %v169
    %192 = vmatprep.subr.mxu0 0.0
    %193 = vmatpush1.xpose.msra.mxu0 %v172
    %194 = vmatprep.subr.mxu0 0.0
    %195 = vmatpush1.xpose.msra.mxu0 %v175
    %196 = vmatprep.subr.mxu0 0.0
    %197 = vmatpush1.xpose.msra.mxu0 %v178
    %198 = vmatprep.subr.mxu0 0.0
    %199 = vmatpush1.xpose.msra.mxu0 %v181
    %200 = vmatprep.subr.mxu0 0.0
    %201 = vmatpush1.xpose.msra.mxu0 %v184
    %202 = vmatprep.subr.mxu0 0.0
    %203 = vmatpush1.xpose.msra.mxu0 0.0
    %204 = vmatprep.subr.mxu0 0.0
    %205 = vmatpush1.xpose.msra.mxu0 0.0
    %206 = vmatprep.subr.mxu0 0.0
    %207 = vmatpush1.xpose.msra.mxu0 0.0
    %208 = vmatprep.subr.mxu0 0.0
    %209 = vmatpush1.xpose.msra.mxu0 0.0
    %210 = vmatprep.subr.mxu0 0.0
    %211 = vmatpush1.xpose.msra.mxu0 0.0
    %212 = vmatprep.subr.mxu0 0.0
    %213 = vmatpush1.xpose.msra.mxu0 0.0
    %214 = vmatprep.subr.mxu0 0.0
    %215 = vmatpush1.xpose.msra.mxu0 0.0
    %216 = vmatprep.subr.mxu0 0.0
    %217 = vmatpush1.xpose.msra.mxu0 0.0
    %218 = vmatprep.subr.mxu0 0.0
    %219 = vmatpush1.xpose.msra.mxu0 0.0
    %220 = vmatprep.subr.mxu0 0.0
    %221 = vmatpush1.xpose.msra.mxu0 0.0
    %222 = vmatprep.subr.mxu0 0.0
    %223 = vmatpush1.xpose.msra.mxu0 0.0
    %224 = vmatprep.subr.mxu0 0.0
    %225 = vmatpush1.xpose.msra.mxu0 0.0
    %226 = vmatprep.subr.mxu0 0.0
    %227 = vmatpush1.xpose.msra.mxu0 0.0
    %228 = vmatprep.subr.mxu0 0.0
    %229 = vmatpush1.xpose.msra.mxu0 0.0
    %230 = vmatprep.subr.mxu0 0.0
    %231 = vmatpush1.xpose.msra.mxu0 0.0
    %232 = vmatprep.subr.mxu0 0.0
    %233 = vmatpush1.xpose.msra.mxu0 0.0
    %234 = vmatprep.subr.mxu0 0.0
    %235 = vmatpush1.xpose.msra.mxu0 0.0
    %236 = vmatprep.subr.mxu0 0.0
    %237 = vmatpush1.xpose.msra.mxu0 0.0
    %238 = vmatprep.subr.mxu0 0.0
    %239 = vmatpush1.xpose.msra.mxu0 0.0
    %240 = vmatprep.subr.mxu0 0.0
    %241 = vmatpush1.xpose.msra.mxu0 0.0
    %242 = vmatprep.subr.mxu0 0.0
    %243 = vmatpush1.xpose.msra.mxu0 0.0
    %244 = vmatprep.subr.mxu0 0.0
    %245 = vmatpush1.xpose.msra.mxu0 0.0
    %246 = vmatprep.subr.mxu0 0.0
    %247 = vmatpush1.xpose.msra.mxu0 0.0
    %248 = vmatprep.subr.mxu0 0.0
    %249 = vmatpush1.xpose.msra.mxu0 0.0
    %250 = vmatprep.mubr.f32.mxu0 0.0
    %251 = vmatmul.mubr.f32.gmra.mrb[0].mxu0 %v51
    %v252 = vpop.f32.mrb[0].mxu0
    %v253 = vadd.f32 %v160, %v252
    %v254 = vpop.f32.mrb[0].mxu0
    %255 = vmatprep.mubr.f32.mxu0 0.0
    %256 = vmatmul.mubr.f32.gmra.mrb[0].mxu0 %v54
    %v257 = vpop.f32.mrb[0].mxu0
    %v258 = vadd.f32 %v160, %v257
    %v259 = vpop.f32.mrb[0].mxu0
    %260 = vdwg.mxu0
    %v261 = vsub.f32 0.0, %v147
    %v262 = vsub.f32 0.0, %v152
    %v263 = vmul.f32 %v261, 1.442695
    %v264 = vpow.pop %v263
    %v265 = vmul.f32 %v262, 1.442695
    %v266 = vpow.pop %v265
    %v267 = vadd.f32 %v264, 1.0
    %v268 = vadd.f32 %v266, 1.0
    %v269 = vrcp.pop %v267
    %v270 = vrcp.pop %v268
    %v271 = vmul.f32 %v147, %v269
    %v272 = vmul.f32 %v152, %v270
    %v273 = vmul.f32 %v271, %v253
    %v274 = vmul.f32 %v272, %v258
    %p275 = scmp.eq.s32.totalorder 0, 0
    // Predicated region
    $region26: #{tpu_custom_call.1} parent=1 // pred_check
      %p276 = pneg %p275
    $region27: #{tpu_custom_call.1} parent=1 // pred_check_branch
      %278 = sbr.rel (%p276) target = $region29
    $region28: #{tpu_custom_call.1} parent=1 // pred_region
      %v279 = vld [vmem:[%s4] sm:$0xff]
      %v280 = vld [vmem:[%s4 + $0x8] sm:$0xff]
      %v281 = vld [vmem:[%s4 + $0x10] sm:$0xff]
      %v282 = vld [vmem:[%s4 + $0x18] sm:$0xff]
      %v283 = vld [vmem:[%s4 + $0x20] sm:$0xff]
      %v284 = vld [vmem:[%s4 + $0x28] sm:$0xff]
      %v285 = vld [vmem:[%s4 + $0x30] sm:$0xff]
      %v286 = vld [vmem:[%s4 + $0x38] sm:$0xff]
      %vm287 = vcmask 523264
      %v289 = vsel %vm287, %v273, 0
      %v292 = vsel %vm287, %v274, 0
      %294 = vmatprep.subr.mxu0 0.0
      %295 = vmatpush1.msra.mxu0 %v279
      %296 = vmatprep.subr.mxu0 0.0
      %297 = vmatpush1.msra.mxu0 %v280
      %298 = vmatprep.subr.mxu0 0.0
      %299 = vmatpush1.msra.mxu0 %v281
      %300 = vmatprep.subr.mxu0 0.0
      %301 = vmatpush1.msra.mxu0 %v282
      %302 = vmatprep.subr.mxu0 0.0
      %303 = vmatpush1.msra.mxu0 %v283
      %304 = vmatprep.subr.mxu0 0.0
      %305 = vmatpush1.msra.mxu0 %v284
      %306 = vmatprep.subr.mxu0 0.0
      %307 = vmatpush1.msra.mxu0 %v285
      %308 = vmatprep.subr.mxu0 0.0
      %309 = vmatpush1.msra.mxu0 %v286
      %310 = vmatprep.subr.mxu0 0.0
      %311 = vmatpush1.msra.mxu0 0.0
      %312 = vmatprep.subr.mxu0 0.0
      %313 = vmatpush1.msra.mxu0 0.0
      %314 = vmatprep.subr.mxu0 0.0
      %315 = vmatpush1.msra.mxu0 0.0
      %316 = vmatprep.subr.mxu0 0.0
      %317 = vmatpush1.msra.mxu0 0.0
      %318 = vmatprep.subr.mxu0 0.0
      %319 = vmatpush1.msra.mxu0 0.0
      %320 = vmatprep.subr.mxu0 0.0
      %321 = vmatpush1.msra.mxu0 0.0
      %322 = vmatprep.subr.mxu0 0.0
      %323 = vmatpush1.msra.mxu0 0.0
      %324 = vmatprep.subr.mxu0 0.0
      %325 = vmatpush1.msra.mxu0 0.0
      %326 = vmatprep.subr.mxu0 0.0
      %327 = vmatpush1.msra.mxu0 0.0
      %328 = vmatprep.subr.mxu0 0.0
      %329 = vmatpush1.msra.mxu0 0.0
      %330 = vmatprep.subr.mxu0 0.0
      %331 = vmatpush1.msra.mxu0 0.0
      %332 = vmatprep.subr.mxu0 0.0
      %333 = vmatpush1.msra.mxu0 0.0
      %334 = vmatprep.subr.mxu0 0.0
      %335 = vmatpush1.msra.mxu0 0.0
      %336 = vmatprep.subr.mxu0 0.0
      %337 = vmatpush1.msra.mxu0 0.0
      %338 = vmatprep.subr.mxu0 0.0
      %339 = vmatpush1.msra.mxu0 0.0
      %340 = vmatprep.subr.mxu0 0.0
      %341 = vmatpush1.msra.mxu0 0.0
      %342 = vmatprep.subr.mxu0 0.0
      %343 = vmatpush1.msra.mxu0 0.0
      %344 = vmatprep.subr.mxu0 0.0
      %345 = vmatpush1.msra.mxu0 0.0
      %346 = vmatprep.subr.mxu0 0.0
      %347 = vmatpush1.msra.mxu0 0.0
      %348 = vmatprep.subr.mxu0 0.0
      %349 = vmatpush1.msra.mxu0 0.0
      %350 = vmatprep.subr.mxu0 0.0
      %351 = vmatpush1.msra.mxu0 0.0
      %352 = vmatprep.subr.mxu0 0.0
      %353 = vmatpush1.msra.mxu0 0.0
      %354 = vmatprep.subr.mxu0 0.0
      %355 = vmatpush1.msra.mxu0 0.0
      %356 = vmatprep.subr.mxu0 0.0
      %357 = vmatpush1.msra.mxu0 0.0
      %358 = vmatprep.mubr.f32.mxu0 0.0
      %359 = vmatmul.mubr.f32.gmra.mrb[0].mxu0 %v289
      %v360 = vpop.f32.mrb[0].mxu0
      %v361 = vadd.f32 0.0, %v360
      %v362 = vpop.f32.mrb[0].mxu0
      %363 = vmatprep.mubr.f32.mxu0 0.0
      %364 = vmatmul.mubr.f32.gmra.mrb[0].mxu0 %v292
      %v365 = vpop.f32.mrb[0].mxu0
      %v366 = vadd.f32 0.0, %v365
      %v367 = vpop.f32.mrb[0].mxu0
      %368 = vdwg.mxu0
      %369 = vst.msk [vmem:[#allocation2] sm:$0xff] %vm49, %v361
      %370 = vst.msk [vmem:[#allocation2 + $0x8] sm:$0xff] %vm49, %v366
    $region29: #{tpu_custom_call.1} parent=1 // pred_fallthru
      _
    %p371 = scmp.gt.s32.totalorder 0, 0
    // Predicated region
    $region30: #{tpu_custom_call.1} parent=1 // pred_check
      %p372 = pneg %p371
    $region31: #{tpu_custom_call.1} parent=1 // pred_check_branch
      %374 = sbr.rel (%p372) target = $region33
    $region32: #{tpu_custom_call.1} parent=1 // pred_region
      %v375 = vld [vmem:[#allocation2] sm:$0xff]
      %v376 = vld [vmem:[#allocation2 + $0x8] sm:$0xff]
      %v377 = vld [vmem:[%s4] sm:$0xff]
      %v378 = vld [vmem:[%s4 + $0x8] sm:$0xff]
      %v379 = vld [vmem:[%s4 + $0x10] sm:$0xff]
      %v380 = vld [vmem:[%s4 + $0x18] sm:$0xff]
      %v381 = vld [vmem:[%s4 + $0x20] sm:$0xff]
      %v382 = vld [vmem:[%s4 + $0x28] sm:$0xff]
      %v383 = vld [vmem:[%s4 + $0x30] sm:$0xff]
      %v384 = vld [vmem:[%s4 + $0x38] sm:$0xff]
      %vm385 = vcmask 523264
      %v387 = vsel %vm385, %v273, 0
      %v390 = vsel %vm385, %v274, 0
      %392 = vmatprep.subr.mxu0 0.0
      %393 = vmatpush1.msra.mxu0 %v377
      %394 = vmatprep.subr.mxu0 0.0
      %395 = vmatpush1.msra.mxu0 %v378
      %396 = vmatprep.subr.mxu0 0.0
      %397 = vmatpush1.msra.mxu0 %v379
      %398 = vmatprep.subr.mxu0 0.0
      %399 = vmatpush1.msra.mxu0 %v380
      %400 = vmatprep.subr.mxu0 0.0
      %401 = vmatpush1.msra.mxu0 %v381
      %402 = vmatprep.subr.mxu0 0.0
      %403 = vmatpush1.msra.mxu0 %v382
      %404 = vmatprep.subr.mxu0 0.0
      %405 = vmatpush1.msra.mxu0 %v383
      %406 = vmatprep.subr.mxu0 0.0
      %407 = vmatpush1.msra.mxu0 %v384
      %408 = vmatprep.subr.mxu0 0.0
      %409 = vmatpush1.msra.mxu0 0.0
      %410 = vmatprep.subr.mxu0 0.0
      %411 = vmatpush1.msra.mxu0 0.0
      %412 = vmatprep.subr.mxu0 0.0
      %413 = vmatpush1.msra.mxu0 0.0
      %414 = vmatprep.subr.mxu0 0.0
      %415 = vmatpush1.msra.mxu0 0.0
      %416 = vmatprep.subr.mxu0 0.0
      %417 = vmatpush1.msra.mxu0 0.0
      %418 = vmatprep.subr.mxu0 0.0
      %419 = vmatpush1.msra.mxu0 0.0
      %420 = vmatprep.subr.mxu0 0.0
      %421 = vmatpush1.msra.mxu0 0.0
      %422 = vmatprep.subr.mxu0 0.0
      %423 = vmatpush1.msra.mxu0 0.0
      %424 = vmatprep.subr.mxu0 0.0
      %425 = vmatpush1.msra.mxu0 0.0
      %426 = vmatprep.subr.mxu0 0.0
      %427 = vmatpush1.msra.mxu0 0.0
      %428 = vmatprep.subr.mxu0 0.0
      %429 = vmatpush1.msra.mxu0 0.0
      %430 = vmatprep.subr.mxu0 0.0
      %431 = vmatpush1.msra.mxu0 0.0
      %432 = vmatprep.subr.mxu0 0.0
      %433 = vmatpush1.msra.mxu0 0.0
      %434 = vmatprep.subr.mxu0 0.0
      %435 = vmatpush1.msra.mxu0 0.0
      %436 = vmatprep.subr.mxu0 0.0
      %437 = vmatpush1.msra.mxu0 0.0
      %438 = vmatprep.subr.mxu0 0.0
      %439 = vmatpush1.msra.mxu0 0.0
      %440 = vmatprep.subr.mxu0 0.0
      %441 = vmatpush1.msra.mxu0 0.0
      %442 = vmatprep.subr.mxu0 0.0
      %443 = vmatpush1.msra.mxu0 0.0
      %444 = vmatprep.subr.mxu0 0.0
      %445 = vmatpush1.msra.mxu0 0.0
      %446 = vmatprep.subr.mxu0 0.0
      %447 = vmatpush1.msra.mxu0 0.0
      %448 = vmatprep.subr.mxu0 0.0
      %449 = vmatpush1.msra.mxu0 0.0
      %450 = vmatprep.subr.mxu0 0.0
      %451 = vmatpush1.msra.mxu0 0.0
      %452 = vmatprep.subr.mxu0 0.0
      %453 = vmatpush1.msra.mxu0 0.0
      %454 = vmatprep.subr.mxu0 0.0
      %455 = vmatpush1.msra.mxu0 0.0
      %456 = vmatprep.mubr.f32.mxu0 0.0
      %457 = vmatmul.mubr.f32.gmra.mrb[0].mxu0 %v387
      %v458 = vpop.f32.mrb[0].mxu0
      %v459 = vadd.f32 0.0, %v458
      %v460 = vpop.f32.mrb[0].mxu0
      %461 = vmatprep.mubr.f32.mxu0 0.0
      %462 = vmatmul.mubr.f32.gmra.mrb[0].mxu0 %v390
      %v463 = vpop.f32.mrb[0].mxu0
      %v464 = vadd.f32 0.0, %v463
      %v465 = vpop.f32.mrb[0].mxu0
      %466 = vdwg.mxu0
      %v467 = vadd.f32 %v375, %v459
      %v468 = vadd.f32 %v376, %v464
      %469 = vst.msk [vmem:[#allocation2] sm:$0xff] %vm49, %v467
      %470 = vst.msk [vmem:[#allocation2 + $0x8] sm:$0xff] %vm49, %v468
    $region33: #{tpu_custom_call.1} parent=1 // pred_fallthru
      _
    // Predicated region
    $region34: #{tpu_custom_call.1} parent=1 // pred_check
      %p471 = pneg %p275
    $region35: #{tpu_custom_call.1} parent=1 // pred_check_branch
      %473 = sbr.rel (%p471) target = $region37
    $region36: #{tpu_custom_call.1} parent=1 // pred_region
      %v474 = vld [vmem:[#allocation2] sm:$0xff]
      %v475 = vld [vmem:[#allocation2 + $0x8] sm:$0xff]
      %v476 = vld [vmem:[%s5] sm:$0x1]
      %v478 = vlaneseq
      %v479 = vshrl.u32 %v478, 7
      %v480 = vsub.s32 0, %v479
      %v481 = vrot.slane %v476, %v480
      %v483 = vadd.f32 %v474, %v481
      %v484 = vadd.f32 %v475, %v481
      %485 = vst.msk [vmem:[#allocation3] sm:$0xff] %vm49, %v483
      %486 = vst.msk [vmem:[#allocation3 + $0x8] sm:$0xff] %vm49, %v484
    $region37: #{tpu_custom_call.1} parent=1 // pred_fallthru
      _
    // Predicated region
    $region38: #{tpu_custom_call.1} parent=1 // pred_check
      _
    $region39: #{tpu_custom_call.1} parent=1 // pred_check_branch
      %488 = sbr.rel (0) target = $region41
    $region40: #{tpu_custom_call.1} parent=1 // pred_region
      %s490 = ssub.s32 256, 256
      %491 = vsyncadd [#allocation4], %s490
      %s492 = sshll.u32 [#allocation3], 4
      %s493 = int_to_ptr.vmem [resolvable:$true] %s492
      %498 = dma.vmem_to_hbm [thread:$0]  %s493, 256, %s6, [#allocation4], 128, 128, 8
    $region41: #{tpu_custom_call.1} parent=1 // pred_fallthru
      _
    // Predicated region
    $region42: #{tpu_custom_call.1} parent=1 // pred_check
      _
    $region43: #{tpu_custom_call.1} parent=1 // pred_check_branch
      %500 = sbr.rel (0) target = $region45
    $region44: #{tpu_custom_call.1} parent=1 // pred_region
      %501 = dma.done [#allocation4], 256
    $region45: #{tpu_custom_call.1} parent=1 // pred_fallthru
      _
    %502 = vsyncpa [#allocation4], 1

</llo_original>
